<compile_context>
chip_gen: v7x
topology: tpu7x:2x2x1
jax: 0.10.0
libtpu: 0.0.40
codegen_flags: <defaults>
</compile_context>

<pallas_src>
import collections

import jax
import jax.numpy as jnp
from jax.experimental import pallas as pl
from jax.experimental.pallas import tpu as pltpu

SamplerOutput = collections.namedtuple("SamplerOutput", ["weight", "bias"])


def _weight_gen_kernel(emb_ref, wg_ref, bg_ref, w_out_ref):
    """One N-tile of the weight generator.

    emb_ref   : (B, P)   task/layer embeddings (wg dtype)
    wg_ref    : (P, TN)  weight_generator weight tile (transposed vs PyTorch)
    bg_ref    : (1, TN)  weight_generator bias tile (f32)
    w_out_ref : (B, TN)  generated adapter-weight tile
    """
    w = jnp.dot(emb_ref[...], wg_ref[...], preferred_element_type=jnp.float32)
    w_out_ref[...] = (w + bg_ref[...]).astype(w_out_ref.dtype)


def _bias_gen_kernel(emb_ref, wb_ref, bb_ref, b_out_ref):
    """One-shot bias generator: (B, P) @ (P, I) + bb."""
    b = jnp.dot(emb_ref[...], wb_ref[...], preferred_element_type=jnp.float32)
    b_out_ref[...] = (b + bb_ref[...]).astype(b_out_ref.dtype)


def _device_info():
    """(vmem_budget_bytes, has_two_tensorcores) for the current TPU generation."""
    try:
        kind = jax.devices()[0].device_kind.lower()
    except Exception:  # pragma: no cover - defensive
        kind = ""
    if "v5" in kind:
        budget = 12 << 20        # v5e scoped-VMEM default is 16 MiB
    else:
        budget = 24 << 20        # v6e / v7x scoped-VMEM default is 32 MiB
    two_tc = "v7" in kind        # v7x: 2 TensorCores per chip
    return budget, two_tc


def _select_tile_n(io, p, b, wg_itemsize, out_itemsize, vmem_budget,
                   max_tile_n, two_tc):
    """Largest lane-tile that fits the VMEM budget (double-buffered)."""
    # Per-lane bytes per step: 2x (wg tile + output tile + f32 bg tile).
    per_lane = 2 * (p * wg_itemsize + b * out_itemsize + 4)
    tn_cap = max(128, vmem_budget // per_lane)
    if max_tile_n is not None:
        tn_cap = min(tn_cap, max(128, max_tile_n))
    if io <= tn_cap:
        tn = io
    else:
        tn = max(128, (tn_cap // 128) * 128)
    # v7x: don't collapse to a single grid step -- give each TC a half.
    if two_tc and tn == io and io >= 256:
        half = ((io + 1) // 2 + 127) // 128 * 128
        if half < io:
            tn = half
    return tn


def adapter_layers_hypernet(embeddings, wg, bg, wb, bb,
                            input_dim, output_dim,
                            *, out_dtype=None, max_tile_n=None,
                            vmem_budget_bytes=None):
    """Pallas implementation of AdapterLayersHyperNet.forward.

    embeddings : (P,) single task/layer embedding (module semantics), or
                 (B, P) to generate B adapters while streaming wg only once
                 (the documented fast path: B = num_layers * num_tasks).
    wg : (P, input_dim*output_dim)  weight_generator weight (transposed vs torch)
    bg : (input_dim*output_dim,)    weight_generator bias (f32)
    wb : (P, input_dim)             bias_generator weight (transposed vs torch)
    bb : (input_dim,)               bias_generator bias (f32)

    Returns SamplerOutput(weight, bias) with shapes
      (input_dim, output_dim), (input_dim,)          for 1-D embeddings
      (B, input_dim, output_dim), (B, input_dim)     for 2-D embeddings
    """
    squeeze = embeddings.ndim == 1
    emb = embeddings.reshape(1, -1) if squeeze else embeddings
    emb = emb.astype(wg.dtype)            # keep the matmul in the weights' dtype
    B, P = emb.shape
    IO = input_dim * output_dim
    if out_dtype is None:
        out_dtype = wg.dtype
    wg_itemsize = jnp.dtype(wg.dtype).itemsize
    out_itemsize = jnp.dtype(out_dtype).itemsize

    budget, two_tc = _device_info()
    if vmem_budget_bytes is not None:
        budget = vmem_budget_bytes
    tn = _select_tile_n(IO, P, B, wg_itemsize, out_itemsize, budget,
                        max_tile_n, two_tc)
    num_tiles = pl.cdiv(IO, tn)

    bg2 = bg.reshape(1, IO)
    bb2 = bb.reshape(1, input_dim)

    cost = pl.CostEstimate(
        flops=2 * B * P * IO,
        transcendentals=0,
        bytes_accessed=int(P * IO * wg_itemsize      # wg stream (dominant)
                           + IO * 4                   # bg (f32)
                           + B * P * wg_itemsize      # embeddings
                           + B * IO * out_itemsize),  # weight output
    )

    # ---- streamed weight generator: (B, P) @ (P, IO) + bg --------------
    w_flat = pl.pallas_call(
        _weight_gen_kernel,
        out_shape=jax.ShapeDtypeStruct((B, IO), out_dtype),
        grid=(num_tiles,),
        in_specs=[
            pl.BlockSpec((B, P), lambda j: (0, 0)),      # embeddings (resident)
            pl.BlockSpec((P, tn), lambda j: (0, j)),      # wg tile (streamed)
            pl.BlockSpec((1, tn), lambda j: (0, j)),      # bg tile (streamed)
        ],
        out_specs=pl.BlockSpec((B, tn), lambda j: (0, j)),
        compiler_params=pltpu.CompilerParams(
            dimension_semantics=("parallel",)),
        cost_estimate=cost,
    )(emb, wg, bg2)

    # ---- one-shot bias generator: (B, P) @ (P, I) + bb ------------------
    bias = pl.pallas_call(
        _bias_gen_kernel,
        out_shape=jax.ShapeDtypeStruct((B, input_dim), out_dtype),
        grid=(1,),
        in_specs=[
            pl.BlockSpec((B, P), lambda j: (0, 0)),
            pl.BlockSpec((P, input_dim), lambda j: (0, 0)),
            pl.BlockSpec((1, input_dim), lambda j: (0, 0)),
        ],
        out_specs=pl.BlockSpec((B, input_dim), lambda j: (0, 0)),
        compiler_params=pltpu.CompilerParams(
            dimension_semantics=("arbitrary",)),
    )(emb, wb, bb2)

    weight = w_flat.reshape(B, input_dim, output_dim)   # .view(input_dim, output_dim)
    if squeeze:
        return SamplerOutput(weight=weight[0], bias=bias[0])
    return SamplerOutput(weight=weight, bias=bias)


if __name__ == "__main__":
    # Small, deterministic synthetic configuration.
    projection_dim = 64
    input_dim = 32
    output_dim = 24           # IO = 768

    key = jax.random.PRNGKey(0)
    k_emb, k_wg, k_bg, k_wb, k_bb = jax.random.split(key, 5)

    # PyTorch nn.Linear default init: U(-1/sqrt(fan_in), 1/sqrt(fan_in)).
    bound = 1.0 / (projection_dim ** 0.5)
    embeddings = jax.random.normal(k_emb, (projection_dim,), jnp.float32)
    # Stored transposed vs PyTorch (fan_in first); kept in bf16 (native dtype).
    wg = jax.random.uniform(k_wg, (projection_dim, input_dim * output_dim),
                            jnp.float32, -bound, bound).astype(jnp.bfloat16)
    bg = jax.random.uniform(k_bg, (input_dim * output_dim,),
                            jnp.float32, -bound, bound)
    wb = jax.random.uniform(k_wb, (projection_dim, input_dim),
                            jnp.float32, -bound, bound).astype(jnp.bfloat16)
    bb = jax.random.uniform(k_bb, (input_dim,),
                            jnp.float32, -bound, bound)

    emb32 = embeddings.astype(jnp.bfloat16).astype(jnp.float32).reshape(1, -1)
    wg32, wb32 = wg.astype(jnp.float32), wb.astype(jnp.float32)
    w_ref = (emb32 @ wg32 + bg.reshape(1, -1)).reshape(input_dim, output_dim)
    b_ref = (emb32 @ wb32 + bb.reshape(1, -1)).reshape(-1)

    # ---- single embedding, default (budget-sized, typically 1 tile) ----
    out = adapter_layers_hypernet(embeddings, wg, bg, wb, bb,
                                  input_dim, output_dim)
    jax.block_until_ready(out)
    assert out.weight.shape == (input_dim, output_dim)
    assert out.bias.shape == (input_dim,)
    assert jnp.allclose(out.weight.astype(jnp.float32), w_ref, atol=2e-2, rtol=2e-2)
    assert jnp.allclose(out.bias.astype(jnp.float32), b_ref, atol=2e-2, rtol=2e-2)

    # ---- forced-tiling path (3 tiles of 256) to exercise the grid ----
    out_t = adapter_layers_hypernet(embeddings, wg, bg, wb, bb,
                                    input_dim, output_dim, max_tile_n=256)
    jax.block_until_ready(out_t)
    assert jnp.allclose(out_t.weight.astype(jnp.float32), w_ref, atol=2e-2, rtol=2e-2)
    assert jnp.allclose(out_t.bias.astype(jnp.float32), b_ref, atol=2e-2, rtol=2e-2)

    # ---- batched embeddings: stream wg once for several layers/tasks ----
    B = 4
    emb_batch = jax.random.normal(jax.random.PRNGKey(1), (B, projection_dim),
                                  jnp.float32)
    out_b = adapter_layers_hypernet(emb_batch, wg, bg, wb, bb,
                                    input_dim, output_dim)
    jax.block_until_ready(out_b)
    assert out_b.weight.shape == (B, input_dim, output_dim)
    assert out_b.bias.shape == (B, input_dim)

    embb32 = emb_batch.astype(jnp.bfloat16).astype(jnp.float32)
    w_ref_b = (embb32 @ wg32 + bg.reshape(1, -1)).reshape(B, input_dim, output_dim)
    b_ref_b = embb32 @ wb32 + bb.reshape(1, -1)
    assert jnp.allclose(out_b.weight.astype(jnp.float32), w_ref_b,
                        atol=2e-2, rtol=2e-2)
    assert jnp.allclose(out_b.bias.astype(jnp.float32), b_ref_b,
                        atol=2e-2, rtol=2e-2)

    # ---- non-divisible IO with forced tiling (partial last block) ----
    in2, out2 = 20, 19        # IO = 380 -> tiles of 256 + 124 (masked)
    k2 = jax.random.split(jax.random.PRNGKey(2), 4)
    wg2 = jax.random.uniform(k2[0], (projection_dim, in2 * out2),
                             jnp.float32, -bound, bound).astype(jnp.bfloat16)
    bg2 = jax.random.uniform(k2[1], (in2 * out2,), jnp.float32, -bound, bound)
    wb2 = jax.random.uniform(k2[2], (projection_dim, in2),
                             jnp.float32, -bound, bound).astype(jnp.bfloat16)
    bb2 = jax.random.uniform(k2[3], (in2,), jnp.float32, -bound, bound)
    out_nd = adapter_layers_hypernet(embeddings, wg2, bg2, wb2, bb2,
                                     in2, out2, max_tile_n=256)
    jax.block_until_ready(out_nd)
    w_ref_nd = (emb32 @ wg2.astype(jnp.float32) + bg2.reshape(1, -1)).reshape(in2, out2)
    b_ref_nd = (emb32 @ wb2.astype(jnp.float32) + bb2.reshape(1, -1)).reshape(-1)
    assert jnp.allclose(out_nd.weight.astype(jnp.float32), w_ref_nd,
                        atol=2e-2, rtol=2e-2)
    assert jnp.allclose(out_nd.bias.astype(jnp.float32), b_ref_nd,
                        atol=2e-2, rtol=2e-2)

    print("KERNEL_OK")
</pallas_src>

<mosaic_0001>
module attributes {stable_mosaic.version = 11 : i64} {
  func.func @_weight_gen_kernel(%arg0: i32, %arg1: memref<1x64xbf16, #tpu.memory_space<vmem>>, %arg2: memref<64x768xbf16, #tpu.memory_space<vmem>>, %arg3: memref<1x768xf32, #tpu.memory_space<vmem>>, %arg4: memref<1x768xbf16, #tpu.memory_space<vmem>>) attributes {dimension_semantics = [#tpu.dimension_semantics<parallel>], iteration_bounds = array<i64: 1>, scalar_prefetch = 0 : i64, scratch_operands = 0 : i64, tpu.core_type = #tpu.core_type<tc>, window_params = [{pipeline_mode = #tpu.pipeline_mode<synchronous>, transform_indices = @transform_0, window_bounds = array<i64: 1, 64>}, {transform_indices = @transform_1, window_bounds = array<i64: 64, 768>}, {transform_indices = @transform_2, window_bounds = array<i64: 1, 768>}, {transform_indices = @transform_3, window_bounds = array<i64: 1, 768>}]} {
    %c0 = arith.constant 0 : index
    %c0_0 = arith.constant 0 : index
    %0 = vector.load %arg1[%c0, %c0_0] : memref<1x64xbf16, #tpu.memory_space<vmem>>, vector<1x64xbf16>
    %c0_1 = arith.constant 0 : index
    %c0_2 = arith.constant 0 : index
    %1 = vector.load %arg2[%c0_1, %c0_2] : memref<64x768xbf16, #tpu.memory_space<vmem>>, vector<64x768xbf16>
    %cst = arith.constant dense<0.000000e+00> : vector<1x768xf32>
    %2 = tpu.matmul %0, %1, %cst {dimension_numbers = #tpu.dot_dimension_numbers<[1], [0], [0], [1], [0, 0, 1, 1], [], []>} : vector<1x64xbf16>, vector<64x768xbf16>, vector<1x768xf32> -> vector<1x768xf32>
    %c0_3 = arith.constant 0 : index
    %c0_4 = arith.constant 0 : index
    %3 = vector.load %arg3[%c0_3, %c0_4] : memref<1x768xf32, #tpu.memory_space<vmem>>, vector<1x768xf32>
    %4 = arith.addf %2, %3 : vector<1x768xf32>
    %5 = arith.truncf %4 : vector<1x768xf32> to vector<1x768xbf16>
    %c0_5 = arith.constant 0 : index
    %c0_6 = arith.constant 0 : index
    %6 = vector.load %arg4[%c0_5, %c0_6] : memref<1x768xbf16, #tpu.memory_space<vmem>>, vector<1x768xbf16>
    tpu.vector_store %arg4[%c0_5, %c0_6], %5 {strides = array<i32>} : memref<1x768xbf16, #tpu.memory_space<vmem>>, vector<1x768xbf16>,
    return
  }
  func.func @transform_0(%arg0: i32) -> (i32, i32) {
    %c0_i32 = arith.constant 0 : i32
    %c0_i32_0 = arith.constant 0 : i32
    %c0_i32_1 = arith.constant 0 : i32
    return %c0_i32, %c0_i32_0 : i32, i32
  }
  func.func @transform_1(%arg0: i32) -> (i32, i32) {
    %c0_i32 = arith.constant 0 : i32
    %c0_i32_0 = arith.constant 0 : i32
    return %c0_i32, %arg0 : i32, i32
  }
  func.func @transform_2(%arg0: i32) -> (i32, i32) {
    %c0_i32 = arith.constant 0 : i32
    %c0_i32_0 = arith.constant 0 : i32
    return %c0_i32, %arg0 : i32, i32
  }
  func.func @transform_3(%arg0: i32) -> (i32, i32) {
    %c0_i32 = arith.constant 0 : i32
    %c0_i32_0 = arith.constant 0 : i32
    return %c0_i32, %arg0 : i32, i32
  }
}

</mosaic_0001>

<llo_original>
// kernel: tpu_custom_call.1
$region0: #{tpu_custom_call.1}
  #allocation0 [shape = 'u32[]', space=smem, size = 0x4, offset = 0x4, fixed_abs, tag = 'smem constant byte address 0x4 - core index']
  #allocation1 [shape = 'u32[144,128]{1,0:T(1,128)}', space=vmem, size = 0x12000, scoped, tag = 'internal scratch']
  %s0 = inlined_call_operand.hbm [shape: bf16[1,64], index: 0, kind: input, shape index: {}]
  %s1 = inlined_call_operand.hbm [shape: bf16[64,768], index: 1, kind: input, shape index: {}]
  %s2 = inlined_call_operand.vmem [shape: f32[1,768], index: 2, kind: input, shape index: {}]
  %s3 = inlined_call_operand.hbm [shape: bf16[1,768], index: 3, kind: output, shape index: {}]
  %s4 = sld [smem:[#allocation0]]
  $region30: #{tpu_custom_call.1} parent=0
    _
  %s6 = ssub.s32 1, %s4
  %s7 = scalar_select 0, %s6, %s4
  $region1: #{tpu_custom_call.1} parent=0
    #allocation2 [shape = 'u8[512]{0}', space=vmem, size = 0x400, scoped, tag = 'input window, operand 0, single buffered']
    #allocation3 [shape = 's32[1]{0}', space=sflag, size = 0x4, scoped, tag = 'scoped memory for tpu_custom_call.1']
    #allocation4 [shape = 's32[1]{0}', space=sflag, size = 0x4, scoped, tag = 'scoped memory for tpu_custom_call.1']
    #allocation5 [shape = 'u8[98304]{0}', space=vmem, size = 0x18000, scoped, tag = 'input window, operand 1, single buffered']
    #allocation6 [shape = 's32[1]{0}', space=sflag, size = 0x4, scoped, tag = 'scoped memory for tpu_custom_call.1']
    #allocation7 [shape = 'u8[3072]{0}', space=vmem, size = 0xc00, scoped, tag = 'output window, operand 0, single buffered']
    %8 = vsyncpa [#allocation3], 0
    %9 = vsyncpa [#allocation6], 0
    %10 = vsyncpa [#allocation4], 0
    // Predicated region
    $region2: #{tpu_custom_call.1} parent=1 // pred_check
      _
    $region3: #{tpu_custom_call.1} parent=1 // pred_check_branch
      %12 = sbr.rel (0) target = $region5
    $region4: #{tpu_custom_call.1} parent=1 // pred_region
      %s14 = ssub.s32 16, 16
      %15 = vsyncadd [#allocation3], %s14
      %s17 = sshll.u32 [#allocation2], 4
      %s18 = int_to_ptr.vmem [resolvable:$true] %s17
      %20 = dma.hbm_to_vmem [thread:$0]  %s0, 16, %s18, [#allocation3]
    $region5: #{tpu_custom_call.1} parent=1 // pred_fallthru
      _
    // Predicated region
    $region6: #{tpu_custom_call.1} parent=1 // pred_check
      _
    $region7: #{tpu_custom_call.1} parent=1 // pred_check_branch
      %22 = sbr.rel (0) target = $region9
    $region8: #{tpu_custom_call.1} parent=1 // pred_region
      %s24 = ssub.s32 3072, 3072
      %25 = vsyncadd [#allocation6], %s24
      %s26 = sshll.u32 [#allocation5], 4
      %s27 = int_to_ptr.vmem [resolvable:$true] %s26
      %32 = dma.hbm_to_vmem [thread:$0]  %s1, 3072, %s27, [#allocation6], 384, 384, 24
    $region9: #{tpu_custom_call.1} parent=1 // pred_fallthru
      _
    // Predicated region
    $region10: #{tpu_custom_call.1} parent=1 // pred_check
      _
    $region11: #{tpu_custom_call.1} parent=1 // pred_check_branch
      %34 = sbr.rel (0) target = $region13
    $region12: #{tpu_custom_call.1} parent=1 // pred_region
      _
    $region13: #{tpu_custom_call.1} parent=1 // pred_fallthru
      _
    // Predicated region
    $region14: #{tpu_custom_call.1} parent=1 // pred_check
      _
    $region15: #{tpu_custom_call.1} parent=1 // pred_check_branch
      %36 = sbr.rel (0) target = $region17
    $region16: #{tpu_custom_call.1} parent=1 // pred_region
      %37 = dma.done [#allocation3], 16
    $region17: #{tpu_custom_call.1} parent=1 // pred_fallthru
      _
    // Predicated region
    $region18: #{tpu_custom_call.1} parent=1 // pred_check
      _
    $region19: #{tpu_custom_call.1} parent=1 // pred_check_branch
      %39 = sbr.rel (0) target = $region21
    $region20: #{tpu_custom_call.1} parent=1 // pred_region
      %40 = dma.done [#allocation6], 3072
    $region21: #{tpu_custom_call.1} parent=1 // pred_fallthru
      _
    %v42 = vld [vmem:[#allocation2] sm:$0x1]
    %v43 = vld [vmem:[#allocation5] sm:$0xff]
    %v44 = vld [vmem:[#allocation5 + $0x8] sm:$0xff]
    %v45 = vld [vmem:[#allocation5 + $0x10] sm:$0xff]
    %v46 = vld [vmem:[#allocation5 + $0x18] sm:$0xff]
    %v47 = vld [vmem:[#allocation5 + $0x20] sm:$0xff]
    %v48 = vld [vmem:[#allocation5 + $0x28] sm:$0xff]
    %v49 = vld [vmem:[#allocation5 + $0x30] sm:$0xff]
    %v50 = vld [vmem:[#allocation5 + $0x38] sm:$0xff]
    %v51 = vld [vmem:[#allocation5 + $0x40] sm:$0xff]
    %v52 = vld [vmem:[#allocation5 + $0x48] sm:$0xff]
    %v53 = vld [vmem:[#allocation5 + $0x50] sm:$0xff]
    %v54 = vld [vmem:[#allocation5 + $0x58] sm:$0xff]
    %v55 = vld [vmem:[#allocation5 + $0x60] sm:$0xff]
    %v56 = vld [vmem:[#allocation5 + $0x68] sm:$0xff]
    %v57 = vld [vmem:[#allocation5 + $0x70] sm:$0xff]
    %v58 = vld [vmem:[#allocation5 + $0x78] sm:$0xff]
    %v59 = vld [vmem:[#allocation5 + $0x80] sm:$0xff]
    %v60 = vld [vmem:[#allocation5 + $0x88] sm:$0xff]
    %v61 = vld [vmem:[#allocation5 + $0x90] sm:$0xff]
    %v62 = vld [vmem:[#allocation5 + $0x98] sm:$0xff]
    %v63 = vld [vmem:[#allocation5 + $0xa0] sm:$0xff]
    %v64 = vld [vmem:[#allocation5 + $0xa8] sm:$0xff]
    %v65 = vld [vmem:[#allocation5 + $0xb0] sm:$0xff]
    %v66 = vld [vmem:[#allocation5 + $0xb8] sm:$0xff]
    %v67 = vld [vmem:[%s2] sm:$0x3f]
    %v92 = vunpack.c.l.b16 %v43
    %v93 = vunpack.c.h.b16 %v43
    %v94 = vunpack.c.l.b16 %v44
    %v95 = vunpack.c.h.b16 %v44
    %v96 = vunpack.c.l.b16 %v45
    %v97 = vunpack.c.h.b16 %v45
    %v98 = vunpack.c.l.b16 %v46
    %v99 = vunpack.c.h.b16 %v46
    %v100 = vunpack.c.l.b16 %v47
    %v101 = vunpack.c.h.b16 %v47
    %v102 = vunpack.c.l.b16 %v48
    %v103 = vunpack.c.h.b16 %v48
    %v104 = vunpack.c.l.b16 %v49
    %v105 = vunpack.c.h.b16 %v49
    %v106 = vunpack.c.l.b16 %v50
    %v107 = vunpack.c.h.b16 %v50
    %v108 = vunpack.c.l.b16 %v51
    %v109 = vunpack.c.h.b16 %v51
    %v110 = vunpack.c.l.b16 %v52
    %v111 = vunpack.c.h.b16 %v52
    %v112 = vunpack.c.l.b16 %v53
    %v113 = vunpack.c.h.b16 %v53
    %v114 = vunpack.c.l.b16 %v54
    %v115 = vunpack.c.h.b16 %v54
    %v116 = vunpack.c.l.b16 %v55
    %v117 = vunpack.c.h.b16 %v55
    %v118 = vunpack.c.l.b16 %v56
    %v119 = vunpack.c.h.b16 %v56
    %v120 = vunpack.c.l.b16 %v57
    %v121 = vunpack.c.h.b16 %v57
    %v122 = vunpack.c.l.b16 %v58
    %v123 = vunpack.c.h.b16 %v58
    %v124 = vunpack.c.l.b16 %v59
    %v125 = vunpack.c.h.b16 %v59
    %v126 = vunpack.c.l.b16 %v60
    %v127 = vunpack.c.h.b16 %v60
    %v128 = vunpack.c.l.b16 %v61
    %v129 = vunpack.c.h.b16 %v61
    %v130 = vunpack.c.l.b16 %v62
    %v131 = vunpack.c.h.b16 %v62
    %v132 = vunpack.c.l.b16 %v63
    %v133 = vunpack.c.h.b16 %v63
    %v134 = vunpack.c.l.b16 %v64
    %v135 = vunpack.c.h.b16 %v64
    %v136 = vunpack.c.l.b16 %v65
    %v137 = vunpack.c.h.b16 %v65
    %v138 = vunpack.c.l.b16 %v66
    %v139 = vunpack.c.h.b16 %v66
    %v140 = vpack.c.b16 %v98, %v92
    %v141 = vpack.c.b16 %v99, %v93
    %v142 = vpack.c.b16 %v100, %v94
    %v143 = vpack.c.b16 %v101, %v95
    %v144 = vpack.c.b16 %v102, %v96
    %v145 = vpack.c.b16 %v103, %v97
    %v146 = vpack.c.b16 %v110, %v104
    %v147 = vpack.c.b16 %v111, %v105
    %v148 = vpack.c.b16 %v112, %v106
    %v149 = vpack.c.b16 %v113, %v107
    %v150 = vpack.c.b16 %v114, %v108
    %v151 = vpack.c.b16 %v115, %v109
    %v152 = vpack.c.b16 %v122, %v116
    %v153 = vpack.c.b16 %v123, %v117
    %v154 = vpack.c.b16 %v124, %v118
    %v155 = vpack.c.b16 %v125, %v119
    %v156 = vpack.c.b16 %v126, %v120
    %v157 = vpack.c.b16 %v127, %v121
    %v158 = vpack.c.b16 %v134, %v128
    %v159 = vpack.c.b16 %v135, %v129
    %v160 = vpack.c.b16 %v136, %v130
    %v161 = vpack.c.b16 %v137, %v131
    %v162 = vpack.c.b16 %v138, %v132
    %v163 = vpack.c.b16 %v139, %v133
    %v189 = vlaneseq
    %v190 = vshrl.u32 %v189, 7
    %v191 = vsub.s32 0, %v190
    %v192 = vrot.slane %v67, %v191
    %v193 = vlaneseq
    %v194 = vshrl.u32 %v193, 7
    %v195 = vsub.s32 1, %v194
    %v196 = vrot.slane %v67, %v195
    %v197 = vlaneseq
    %v198 = vshrl.u32 %v197, 7
    %v199 = vsub.s32 2, %v198
    %v200 = vrot.slane %v67, %v199
    %v201 = vlaneseq
    %v202 = vshrl.u32 %v201, 7
    %v203 = vsub.s32 3, %v202
    %v204 = vrot.slane %v67, %v203
    %v205 = vlaneseq
    %v206 = vshrl.u32 %v205, 7
    %v207 = vsub.s32 4, %v206
    %v208 = vrot.slane %v67, %v207
    %v209 = vlaneseq
    %v210 = vshrl.u32 %v209, 7
    %v211 = vsub.s32 5, %v210
    %v212 = vrot.slane %v67, %v211
    %vm219 = vcmask 523264
    %v221 = vsel %vm219, %v42, 0
    %223 = vmatprep.subr.bf16.mxu0 %v141
    %224 = vmatpush1.bf16.msra.mxu0 %v140
    %225 = vmatprep.subr.bf16.mxu0 %v147
    %226 = vmatpush1.bf16.msra.mxu0 %v146
    %227 = vmatprep.subr.bf16.mxu0 %v153
    %228 = vmatpush1.bf16.msra.mxu0 %v152
    %229 = vmatprep.subr.bf16.mxu0 %v159
    %230 = vmatpush1.bf16.msra.mxu0 %v158
    %231 = vmatprep.subr.bf16.mxu0 0
    %232 = vmatpush1.bf16.msra.mxu0 0
    %233 = vmatprep.subr.bf16.mxu0 0
    %234 = vmatpush1.bf16.msra.mxu0 0
    %235 = vmatprep.subr.bf16.mxu0 0
    %236 = vmatpush1.bf16.msra.mxu0 0
    %237 = vmatprep.subr.bf16.mxu0 0
    %238 = vmatpush1.bf16.msra.mxu0 0
    %239 = vmatprep.subr.bf16.mxu0 0
    %240 = vmatpush1.bf16.msra.mxu0 0
    %241 = vmatprep.subr.bf16.mxu0 0
    %242 = vmatpush1.bf16.msra.mxu0 0
    %243 = vmatprep.subr.bf16.mxu0 0
    %244 = vmatpush1.bf16.msra.mxu0 0
    %245 = vmatprep.subr.bf16.mxu0 0
    %246 = vmatpush1.bf16.msra.mxu0 0
    %247 = vmatprep.subr.bf16.mxu0 0
    %248 = vmatpush1.bf16.msra.mxu0 0
    %249 = vmatprep.subr.bf16.mxu0 0
    %250 = vmatpush1.bf16.msra.mxu0 0
    %251 = vmatprep.subr.bf16.mxu0 0
    %252 = vmatpush1.bf16.msra.mxu0 0
    %253 = vmatprep.subr.bf16.mxu0 0
    %254 = vmatpush1.bf16.msra.mxu0 0
    %255 = vmatprep.mubr.bf16.mxu0 0
    %256 = vmatmul.mubr.bf16.gmra.mrb[0].mxu0 %v221
    %v257 = vpop.f32.mrb[0].mxu0
    %v258 = vadd.f32 %v192, %v257
    %v259 = vpop.f32.mrb[0].mxu0
    %v260 = vadd.f32 %v196, %v259
    %v261 = vpop.f32.mrb[0].mxu0
    %v262 = vpop.f32.mrb[0].mxu0
    %263 = vdwg.mxu0
    %264 = vmatprep.subr.bf16.mxu0 %v143
    %265 = vmatpush1.bf16.msra.mxu0 %v142
    %266 = vmatprep.subr.bf16.mxu0 %v149
    %267 = vmatpush1.bf16.msra.mxu0 %v148
    %268 = vmatprep.subr.bf16.mxu0 %v155
    %269 = vmatpush1.bf16.msra.mxu0 %v154
    %270 = vmatprep.subr.bf16.mxu0 %v161
    %271 = vmatpush1.bf16.msra.mxu0 %v160
    %272 = vmatprep.subr.bf16.mxu0 0
    %273 = vmatpush1.bf16.msra.mxu0 0
    %274 = vmatprep.subr.bf16.mxu0 0
    %275 = vmatpush1.bf16.msra.mxu0 0
    %276 = vmatprep.subr.bf16.mxu0 0
    %277 = vmatpush1.bf16.msra.mxu0 0
    %278 = vmatprep.subr.bf16.mxu0 0
    %279 = vmatpush1.bf16.msra.mxu0 0
    %280 = vmatprep.subr.bf16.mxu0 0
    %281 = vmatpush1.bf16.msra.mxu0 0
    %282 = vmatprep.subr.bf16.mxu0 0
    %283 = vmatpush1.bf16.msra.mxu0 0
    %284 = vmatprep.subr.bf16.mxu0 0
    %285 = vmatpush1.bf16.msra.mxu0 0
    %286 = vmatprep.subr.bf16.mxu0 0
    %287 = vmatpush1.bf16.msra.mxu0 0
    %288 = vmatprep.subr.bf16.mxu0 0
    %289 = vmatpush1.bf16.msra.mxu0 0
    %290 = vmatprep.subr.bf16.mxu0 0
    %291 = vmatpush1.bf16.msra.mxu0 0
    %292 = vmatprep.subr.bf16.mxu0 0
    %293 = vmatpush1.bf16.msra.mxu0 0
    %294 = vmatprep.subr.bf16.mxu0 0
    %295 = vmatpush1.bf16.msra.mxu0 0
    %296 = vmatprep.mubr.bf16.mxu0 0
    %297 = vmatmul.mubr.bf16.gmra.mrb[0].mxu0 %v221
    %v298 = vpop.f32.mrb[0].mxu0
    %v299 = vadd.f32 %v200, %v298
    %v300 = vpop.f32.mrb[0].mxu0
    %v301 = vadd.f32 %v204, %v300
    %v302 = vpop.f32.mrb[0].mxu0
    %v303 = vpop.f32.mrb[0].mxu0
    %304 = vdwg.mxu0
    %305 = vmatprep.subr.bf16.mxu0 %v145
    %306 = vmatpush1.bf16.msra.mxu0 %v144
    %307 = vmatprep.subr.bf16.mxu0 %v151
    %308 = vmatpush1.bf16.msra.mxu0 %v150
    %309 = vmatprep.subr.bf16.mxu0 %v157
    %310 = vmatpush1.bf16.msra.mxu0 %v156
    %311 = vmatprep.subr.bf16.mxu0 %v163
    %312 = vmatpush1.bf16.msra.mxu0 %v162
    %313 = vmatprep.subr.bf16.mxu0 0
    %314 = vmatpush1.bf16.msra.mxu0 0
    %315 = vmatprep.subr.bf16.mxu0 0
    %316 = vmatpush1.bf16.msra.mxu0 0
    %317 = vmatprep.subr.bf16.mxu0 0
    %318 = vmatpush1.bf16.msra.mxu0 0
    %319 = vmatprep.subr.bf16.mxu0 0
    %320 = vmatpush1.bf16.msra.mxu0 0
    %321 = vmatprep.subr.bf16.mxu0 0
    %322 = vmatpush1.bf16.msra.mxu0 0
    %323 = vmatprep.subr.bf16.mxu0 0
    %324 = vmatpush1.bf16.msra.mxu0 0
    %325 = vmatprep.subr.bf16.mxu0 0
    %326 = vmatpush1.bf16.msra.mxu0 0
    %327 = vmatprep.subr.bf16.mxu0 0
    %328 = vmatpush1.bf16.msra.mxu0 0
    %329 = vmatprep.subr.bf16.mxu0 0
    %330 = vmatpush1.bf16.msra.mxu0 0
    %331 = vmatprep.subr.bf16.mxu0 0
    %332 = vmatpush1.bf16.msra.mxu0 0
    %333 = vmatprep.subr.bf16.mxu0 0
    %334 = vmatpush1.bf16.msra.mxu0 0
    %335 = vmatprep.subr.bf16.mxu0 0
    %336 = vmatpush1.bf16.msra.mxu0 0
    %337 = vmatprep.mubr.bf16.mxu0 0
    %338 = vmatmul.mubr.bf16.gmra.mrb[0].mxu0 %v221
    %v339 = vpop.f32.mrb[0].mxu0
    %v340 = vadd.f32 %v208, %v339
    %v341 = vpop.f32.mrb[0].mxu0
    %v342 = vadd.f32 %v212, %v341
    %v343 = vpop.f32.mrb[0].mxu0
    %v344 = vpop.f32.mrb[0].mxu0
    %345 = vdwg.mxu0
    %v346 = vpack.c.bf16 %v258, %v258
    %v347 = vpack.c.bf16 %v260, %v260
    %v348 = vpack.c.bf16 %v299, %v299
    %v349 = vpack.c.bf16 %v301, %v301
    %v350 = vpack.c.bf16 %v340, %v340
    %v351 = vpack.c.bf16 %v342, %v342
    %v358 = vcombine.low %v346, %v347
    %v359 = vcombine.low %v348, %v349
    %v360 = vcombine.low %v350, %v351
    %v362 = vunpack.c.l.s4 1966171168
    %v363 = vunpack.c.0.s8 %v362
    %v364 = vlaneseq
    %v365 = vshrl.u32 %v364, 7
    %v366 = vsub.s32 %v363, %v365
    %v367 = vrot.slane %v358, %v366
    %v369 = vunpack.c.l.s4 1966171168
    %v370 = vunpack.c.0.s8 %v369
    %v371 = vlaneseq
    %v372 = vshrl.u32 %v371, 7
    %v373 = vsub.s32 %v370, %v372
    %v374 = vrot.slane %v359, %v373
    %v376 = vunpack.c.l.s4 1966171168
    %v377 = vunpack.c.0.s8 %v376
    %v378 = vlaneseq
    %v379 = vshrl.u32 %v378, 7
    %v380 = vsub.s32 %v377, %v379
    %v381 = vrot.slane %v360, %v380
    %v382 = vcombine.low %v367, %v374
    %v384 = vunpack.c.l.s4 1966171168
    %v385 = vunpack.c.0.s8 %v384
    %v386 = vlaneseq
    %v387 = vshrl.u32 %v386, 7
    %v388 = vsub.s32 %v385, %v387
    %v389 = vrot.slane %v382, %v388
    %v391 = vunpack.c.l.s4 1966171168
    %v392 = vunpack.c.0.s8 %v391
    %v393 = vlaneseq
    %v394 = vshrl.u32 %v393, 7
    %v395 = vsub.s32 %v392, %v394
    %v396 = vrot.slane %v381, %v395
    %v397 = vcombine.low %v389, %v396
    %vm399 = vcmask 1040384
    %vm400 = vsmask.f32 256
    %vm401 = vmand %vm399, %vm400
    %vm402 = vcmask 1041409
    %vm403 = vsmask.f32 1280
    %vm404 = vmand %vm402, %vm403
    %vm405 = vmor %vm404, %vm401
    %vm406 = vcmask 1042434
    %vm407 = vsmask.f32 2304
    %vm408 = vmand %vm406, %vm407
    %vm409 = vmor %vm408, %vm405
    %vm410 = vcmask 1043459
    %vm411 = vsmask.f32 3328
    %vm412 = vmand %vm410, %vm411
    %vm413 = vmor %vm412, %vm409
    %vm414 = vcmask 1044484
    %vm415 = vsmask.f32 4352
    %vm416 = vmand %vm414, %vm415
    %vm417 = vmor %vm416, %vm413
    %vm418 = vcmask 1045509
    %vm419 = vsmask.f32 5376
    %vm420 = vmand %vm418, %vm419
    %vm421 = vmor %vm420, %vm417
    %v422 = vld [vmem:[#allocation7] sm:$0x3f]
    %v423 = vsel %vm421, %v397, %v422
    %424 = vst [vmem:[#allocation7] sm:$0x3f] %v423
    // Predicated region
    $region22: #{tpu_custom_call.1} parent=1 // pred_check
      _
    $region23: #{tpu_custom_call.1} parent=1 // pred_check_branch
      %426 = sbr.rel (0) target = $region25
    $region24: #{tpu_custom_call.1} parent=1 // pred_region
      %s428 = ssub.s32 96, 96
      %429 = vsyncadd [#allocation4], %s428
      %s431 = sshll.u32 [#allocation7], 4
      %s432 = int_to_ptr.vmem [resolvable:$true] %s431
      %434 = dma.vmem_to_hbm [thread:$0]  %s432, 96, %s3, [#allocation4]
    $region25: #{tpu_custom_call.1} parent=1 // pred_fallthru
      _
    // Predicated region
    $region26: #{tpu_custom_call.1} parent=1 // pred_check
      _
    $region27: #{tpu_custom_call.1} parent=1 // pred_check_branch
      %436 = sbr.rel (0) target = $region29
    $region28: #{tpu_custom_call.1} parent=1 // pred_region
      %437 = dma.done [#allocation4], 96
    $region29: #{tpu_custom_call.1} parent=1 // pred_fallthru
      _
    %438 = vsyncpa [#allocation3], 1
    %439 = vsyncpa [#allocation6], 1
    %440 = vsyncpa [#allocation4], 1

</llo_original>
